<compile_context>
chip_gen: v5e
topology: v5e:2x2
jax: 0.10.0
libtpu: 0.0.40
codegen_flags: <defaults>
</compile_context>

<pallas_src>
import functools

import jax
import jax.numpy as jnp
from jax.experimental import pallas as pl
from jax.experimental.pallas import tpu as pltpu


def dot_attention_kernel(proj_ref, enc_ref, ctx_ref, attn_ref,
                         m_sc, l_sc, acc_sc, *,
                         l_valid, tile_l, n_l_tiles):
    # proj_ref : [tB, 1, D]      projected LSTM state (enc dtype)
    # enc_ref  : [tB, tL, D]     encoder tile (native dtype, streamed)
    # ctx_ref  : [tB, 1, D]      context output (resident across L axis)
    # attn_ref : [tB, 1, L_pad]  attention weights output (f32, resident)
    # m_sc     : [tB, 1, 1] f32  running max
    # l_sc     : [tB, 1, 1] f32  running softmax denominator
    # acc_sc   : [tB, 1, D] f32  context accumulator
    i = pl.program_id(1)
    last = n_l_tiles - 1

    @pl.when(i == 0)
    def _init():
        m_sc[...] = jnp.full_like(m_sc, -jnp.inf)
        l_sc[...] = jnp.zeros_like(l_sc)
        acc_sc[...] = jnp.zeros_like(acc_sc)
        attn_ref[...] = jnp.zeros_like(attn_ref)

    proj = proj_ref[...]                       # [tB, 1, D]
    enc = enc_ref[...]                         # [tB, tL, D] native dtype

    # Scores for this L-tile on the MXU, f32 accumulation: [tB, 1, tL]
    s = jnp.einsum("bqd,bkd->bqk", proj, enc,
                   preferred_element_type=jnp.float32)

    if n_l_tiles * tile_l != l_valid:
        # Only the last tile can contain zero-padded rows -> mask them out.
        col = i * tile_l + jax.lax.broadcasted_iota(jnp.int32, s.shape, 2)
        s = jnp.where(col < l_valid, s, -jnp.inf)

    # Online (streaming) softmax update.
    m_prev = m_sc[...]                                                # [tB,1,1]
    m_new = jnp.maximum(m_prev, jnp.max(s, axis=-1, keepdims=True))   # [tB,1,1]
    alpha = jnp.exp(m_prev - m_new)                                   # [tB,1,1]
    p = jnp.exp(s - m_new)                                            # [tB,1,tL]

    l_sc[...] = alpha * l_sc[...] + jnp.sum(p, axis=-1, keepdims=True)
    acc_sc[...] = alpha * acc_sc[...] + jnp.einsum(
        "bqk,bkd->bqd", p.astype(enc.dtype), enc,
        preferred_element_type=jnp.float32)
    m_sc[...] = m_new

    # Keep un-normalized exp-scores resident in the lane-dense attn block,
    # rescaling previously written tiles by the running-max correction.
    if n_l_tiles == 1:
        attn_ref[...] = p
    else:
        attn_ref[...] = attn_ref[...] * alpha
        off = pl.multiple_of(i * tile_l, tile_l)
        attn_ref[:, :, pl.ds(off, tile_l)] = p

    @pl.when(i == last)
    def _finalize():
        inv_l = pl.reciprocal(l_sc[...], approx=False)                # [tB,1,1]
        ctx_ref[...] = (acc_sc[...] * inv_l).astype(ctx_ref.dtype)
        attn_ref[...] = attn_ref[...] * inv_l


def _vmem_limit_bytes():
    cap = 64 * 1024 * 1024
    try:
        info = pltpu.get_tpu_info()
        cap = int(getattr(info, "vmem_capacity_bytes", cap))
    except Exception:
        pass
    # Never request more than half of physical VMEM; at least 16 MiB.
    return min(64 * 1024 * 1024, max(16 * 1024 * 1024, cap // 2))


def _choose_tiles(B, L, D, itemsize, vmem_limit):
    # B tile (leading dim only -> no (8,128) constraint); must divide B.
    if B <= 8 or B % 8 != 0:
        tB = B
    else:
        tB = 8
    # ~1/3 of scoped VMEM for the double-buffered enc stream.
    rows = (vmem_limit // 3) // max(1, 2 * tB * D * itemsize)
    tL = max(128, min(1024, (rows // 128) * 128))
    if L <= tL:
        return tB, L, L                         # single full-L tile, no padding
    L_pad = ((L + tL - 1) // tL) * tL
    return tB, tL, L_pad


def dot_attention(enc_out, h, c, weight, bias):
    """
    enc_out : [L, B, d_enc]
    h, c    : [2, B, d_lstm]
    weight  : [d_enc, 4*d_lstm]   (PyTorch nn.Linear layout)
    bias    : [d_enc]
    returns : (context [B, d_enc], attn_weights [L, B] float32)
    """
    L, B, D = enc_out.shape

    # ---- tiny glue in plain JAX (hoisted out of the kernel) -----------------
    flat_state = jnp.concatenate([h[0], h[1], c[0], c[1]], axis=1)    # [B, 4*d_lstm]
    state_proj = jax.lax.dot_general(
        flat_state, weight,
        dimension_numbers=(((1,), (1,)), ((), ())),                   # no weight.T materialized
        preferred_element_type=jnp.float32) + bias.astype(jnp.float32)
    state_proj = state_proj.astype(enc_out.dtype)
    proj3 = state_proj[:, None, :]                                    # [B, 1, D]

    itemsize = jnp.dtype(enc_out.dtype).itemsize
    vmem_limit = _vmem_limit_bytes()
    tB, tL, L_pad = _choose_tiles(B, L, D, itemsize, vmem_limit)
    n_b_tiles = B // tB
    n_l_tiles = L_pad // tL

    # Layout plumbing: leading-batch layout so kernel contractions are clean
    # MXU batched matmuls and the softmax/attn store are lane-dense over L.
    enc_bld = jnp.transpose(enc_out, (1, 0, 2))                       # [B, L, D]
    if L_pad != L:
        enc_bld = jnp.pad(enc_bld, ((0, 0), (0, L_pad - L), (0, 0)))

    kernel = functools.partial(dot_attention_kernel,
                               l_valid=L, tile_l=tL, n_l_tiles=n_l_tiles)

    ctx3, attn3 = pl.pallas_call(
        kernel,
        out_shape=(
            jax.ShapeDtypeStruct((B, 1, D), enc_out.dtype),
            jax.ShapeDtypeStruct((B, 1, L_pad), jnp.float32),
        ),
        grid=(n_b_tiles, n_l_tiles),
        in_specs=[
            pl.BlockSpec((tB, 1, D), lambda b, i: (b, 0, 0)),
            pl.BlockSpec((tB, tL, D), lambda b, i: (b, i, 0)),
        ],
        out_specs=(
            pl.BlockSpec((tB, 1, D), lambda b, i: (b, 0, 0)),
            pl.BlockSpec((tB, 1, L_pad), lambda b, i: (b, 0, 0)),
        ),
        scratch_shapes=[
            pltpu.VMEM((tB, 1, 1), jnp.float32),   # running max
            pltpu.VMEM((tB, 1, 1), jnp.float32),   # running denom
            pltpu.VMEM((tB, 1, D), jnp.float32),   # context accumulator
        ],
        compiler_params=pltpu.CompilerParams(
            dimension_semantics=("parallel", "arbitrary"),
            vmem_limit_bytes=vmem_limit,
        ),
    )(proj3, enc_bld)

    context = ctx3[:, 0, :]                                           # [B, D]
    attn_weights = jnp.transpose(attn3[:, 0, :L])                     # [L, B] f32
    return context, attn_weights


def _reference(enc_out, h, c, weight, bias):
    flat_state = jnp.concatenate([h[0], h[1], c[0], c[1]], axis=1)
    state_proj = flat_state @ weight.T + bias
    scores = jnp.einsum("bd,lbd->lb", state_proj, enc_out)
    attn = jax.nn.softmax(scores, axis=0)
    context = jnp.einsum("lbd,lb->bd", enc_out, attn)
    return context, attn


if __name__ == "__main__":
    # Small shapes consistent with the module's forward signature.
    L, B, d_enc, d_lstm = 8, 2, 32, 8

    key = jax.random.PRNGKey(0)
    k_enc, k_h, k_c, k_w, k_b = jax.random.split(key, 5)

    enc_out = jax.random.normal(k_enc, (L, B, d_enc), dtype=jnp.float32)
    h = jax.random.normal(k_h, (2, B, d_lstm), dtype=jnp.float32)
    c = jax.random.normal(k_c, (2, B, d_lstm), dtype=jnp.float32)

    # Deterministic parameter init (nn.Linear(d_lstm*4, d_enc) shapes).
    weight = jax.random.normal(k_w, (d_enc, 4 * d_lstm), dtype=jnp.float32) * 0.1
    bias = jax.random.normal(k_b, (d_enc,), dtype=jnp.float32) * 0.1

    ctx, attn = dot_attention(enc_out, h, c, weight, bias)
    jax.block_until_ready((ctx, attn))

    ctx_ref, attn_ref = _reference(enc_out, h, c, weight, bias)
    assert ctx.shape == (B, d_enc) and attn.shape == (L, B)
    assert jnp.allclose(ctx, ctx_ref, atol=1e-4, rtol=1e-4)
    assert jnp.allclose(attn, attn_ref, atol=1e-5, rtol=1e-5)

    print("KERNEL_OK")
</pallas_src>

<mosaic_0001>
module attributes {stable_mosaic.version = 11 : i64} {
  func.func @dot_attention_kernel(%arg0: i32, %arg1: i32, %arg2: memref<2x1x32xf32, #tpu.memory_space<vmem>>, %arg3: memref<2x8x32xf32, #tpu.memory_space<vmem>>, %arg4: memref<2x1x32xf32, #tpu.memory_space<vmem>>, %arg5: memref<2x1x8xf32, #tpu.memory_space<vmem>>, %arg6: memref<2x1x1xf32, #tpu.memory_space<vmem>>, %arg7: memref<2x1x1xf32, #tpu.memory_space<vmem>>, %arg8: memref<2x1x32xf32, #tpu.memory_space<vmem>>) attributes {dimension_semantics = [#tpu.dimension_semantics<parallel>, #tpu.dimension_semantics<arbitrary>], iteration_bounds = array<i64: 1, 1>, scalar_prefetch = 0 : i64, scratch_operands = 3 : i64, tpu.core_type = #tpu.core_type<tc>, window_params = [{transform_indices = @transform_0, window_bounds = array<i64: 2, 1, 32>}, {transform_indices = @transform_1, window_bounds = array<i64: 2, 8, 32>}, {transform_indices = @transform_2, window_bounds = array<i64: 2, 1, 32>}, {transform_indices = @transform_3, window_bounds = array<i64: 2, 1, 8>}]} {
    %c0_i32 = arith.constant 0 : i32
    %0 = arith.cmpi eq, %arg1, %c0_i32 : i32
    %1 = arith.extui %0 : i1 to i32
    %c0_i32_0 = arith.constant 0 : i32
    %2 = arith.cmpi ne, %1, %c0_i32_0 : i32
    scf.if %2 {
      %cst_32 = arith.constant 0xFF800000 : f32
      %32 = vector.broadcast %cst_32 : f32 to vector<2x1x1xf32>
      %c0_33 = arith.constant 0 : index
      %c0_34 = arith.constant 0 : index
      %c0_35 = arith.constant 0 : index
      %33 = vector.load %arg6[%c0_33, %c0_34, %c0_35] : memref<2x1x1xf32, #tpu.memory_space<vmem>>, vector<2x1x1xf32>
      tpu.vector_store %arg6[%c0_33, %c0_34, %c0_35], %32 {strides = array<i32>} : memref<2x1x1xf32, #tpu.memory_space<vmem>>, vector<2x1x1xf32>,
      %cst_36 = arith.constant 0.000000e+00 : f32
      %34 = vector.broadcast %cst_36 : f32 to vector<2x1x1xf32>
      %c0_37 = arith.constant 0 : index
      %c0_38 = arith.constant 0 : index
      %c0_39 = arith.constant 0 : index
      %35 = vector.load %arg7[%c0_37, %c0_38, %c0_39] : memref<2x1x1xf32, #tpu.memory_space<vmem>>, vector<2x1x1xf32>
      tpu.vector_store %arg7[%c0_37, %c0_38, %c0_39], %34 {strides = array<i32>} : memref<2x1x1xf32, #tpu.memory_space<vmem>>, vector<2x1x1xf32>,
      %cst_40 = arith.constant 0.000000e+00 : f32
      %36 = vector.broadcast %cst_40 : f32 to vector<2x1x32xf32>
      %c0_41 = arith.constant 0 : index
      %c0_42 = arith.constant 0 : index
      %c0_43 = arith.constant 0 : index
      %37 = vector.load %arg8[%c0_41, %c0_42, %c0_43] : memref<2x1x32xf32, #tpu.memory_space<vmem>>, vector<2x1x32xf32>
      tpu.vector_store %arg8[%c0_41, %c0_42, %c0_43], %36 {strides = array<i32>} : memref<2x1x32xf32, #tpu.memory_space<vmem>>, vector<2x1x32xf32>,
      %cst_44 = arith.constant 0.000000e+00 : f32
      %38 = vector.broadcast %cst_44 : f32 to vector<2x1x8xf32>
      %c0_45 = arith.constant 0 : index
      %c0_46 = arith.constant 0 : index
      %c0_47 = arith.constant 0 : index
      %39 = vector.load %arg5[%c0_45, %c0_46, %c0_47] : memref<2x1x8xf32, #tpu.memory_space<vmem>>, vector<2x1x8xf32>
      tpu.vector_store %arg5[%c0_45, %c0_46, %c0_47], %38 {strides = array<i32>} : memref<2x1x8xf32, #tpu.memory_space<vmem>>, vector<2x1x8xf32>,
    } else {
    }
    %c0 = arith.constant 0 : index
    %c0_1 = arith.constant 0 : index
    %c0_2 = arith.constant 0 : index
    %3 = vector.load %arg2[%c0, %c0_1, %c0_2] : memref<2x1x32xf32, #tpu.memory_space<vmem>>, vector<2x1x32xf32>
    %c0_3 = arith.constant 0 : index
    %c0_4 = arith.constant 0 : index
    %c0_5 = arith.constant 0 : index
    %4 = vector.load %arg3[%c0_3, %c0_4, %c0_5] : memref<2x8x32xf32, #tpu.memory_space<vmem>>, vector<2x8x32xf32>
    "tpu.trace_start"() <{level = 10 : i32, message = "bqd,bkd->bqk"}> : () -> ()
    %cst = arith.constant dense<0.000000e+00> : vector<2x1x8xf32>
    %5 = tpu.matmul %3, %4, %cst {dimension_numbers = #tpu.dot_dimension_numbers<[2], [2], [1], [1], [0, 0, 0, 1, 1, 1], [0], [0]>} : vector<2x1x32xf32>, vector<2x8x32xf32>, vector<2x1x8xf32> -> vector<2x1x8xf32>
    "tpu.trace_stop"() : () -> ()
    %c0_6 = arith.constant 0 : index
    %c0_7 = arith.constant 0 : index
    %c0_8 = arith.constant 0 : index
    %6 = vector.load %arg6[%c0_6, %c0_7, %c0_8] : memref<2x1x1xf32, #tpu.memory_space<vmem>>, vector<2x1x1xf32>
    %cst_9 = arith.constant dense<0xFF800000> : vector<2x1xf32>
    %7 = vector.multi_reduction <maximumf>, %5, %cst_9 [2] : vector<2x1x8xf32> to vector<2x1xf32>
    %8 = vector.shape_cast %7 : vector<2x1xf32> to vector<2x1x1xf32>
    %9 = arith.maximumf %6, %8 : vector<2x1x1xf32>
    %10 = arith.subf %6, %9 : vector<2x1x1xf32>
    %11 = math.exp %10 : vector<2x1x1xf32>
    %12 = vector.broadcast %9 : vector<2x1x1xf32> to vector<2x1x8xf32>
    %13 = arith.subf %5, %12 : vector<2x1x8xf32>
    %14 = math.exp %13 : vector<2x1x8xf32>
    %c0_10 = arith.constant 0 : index
    %c0_11 = arith.constant 0 : index
    %c0_12 = arith.constant 0 : index
    %15 = vector.load %arg7[%c0_10, %c0_11, %c0_12] : memref<2x1x1xf32, #tpu.memory_space<vmem>>, vector<2x1x1xf32>
    %16 = arith.mulf %11, %15 : vector<2x1x1xf32>
    %cst_13 = arith.constant dense<0.000000e+00> : vector<2x1xf32>
    %17 = vector.multi_reduction <add>, %14, %cst_13 [2] : vector<2x1x8xf32> to vector<2x1xf32>
    %18 = vector.shape_cast %17 : vector<2x1xf32> to vector<2x1x1xf32>
    %19 = arith.addf %16, %18 : vector<2x1x1xf32>
    %c0_14 = arith.constant 0 : index
    %c0_15 = arith.constant 0 : index
    %c0_16 = arith.constant 0 : index
    %20 = vector.load %arg7[%c0_14, %c0_15, %c0_16] : memref<2x1x1xf32, #tpu.memory_space<vmem>>, vector<2x1x1xf32>
    tpu.vector_store %arg7[%c0_14, %c0_15, %c0_16], %19 {strides = array<i32>} : memref<2x1x1xf32, #tpu.memory_space<vmem>>, vector<2x1x1xf32>,
    %c0_17 = arith.constant 0 : index
    %c0_18 = arith.constant 0 : index
    %c0_19 = arith.constant 0 : index
    %21 = vector.load %arg8[%c0_17, %c0_18, %c0_19] : memref<2x1x32xf32, #tpu.memory_space<vmem>>, vector<2x1x32xf32>
    %22 = vector.broadcast %11 : vector<2x1x1xf32> to vector<2x1x32xf32>
    %23 = arith.mulf %22, %21 : vector<2x1x32xf32>
    "tpu.trace_start"() <{level = 10 : i32, message = "bqk,bkd->bqd"}> : () -> ()
    %cst_20 = arith.constant dense<0.000000e+00> : vector<2x1x32xf32>
    %24 = tpu.matmul %14, %4, %cst_20 {dimension_numbers = #tpu.dot_dimension_numbers<[2], [1], [1], [2], [0, 0, 0, 1, 1, 2], [0], [0]>} : vector<2x1x8xf32>, vector<2x8x32xf32>, vector<2x1x32xf32> -> vector<2x1x32xf32>
    "tpu.trace_stop"() : () -> ()
    %25 = arith.addf %23, %24 : vector<2x1x32xf32>
    %c0_21 = arith.constant 0 : index
    %c0_22 = arith.constant 0 : index
    %c0_23 = arith.constant 0 : index
    %26 = vector.load %arg8[%c0_21, %c0_22, %c0_23] : memref<2x1x32xf32, #tpu.memory_space<vmem>>, vector<2x1x32xf32>
    tpu.vector_store %arg8[%c0_21, %c0_22, %c0_23], %25 {strides = array<i32>} : memref<2x1x32xf32, #tpu.memory_space<vmem>>, vector<2x1x32xf32>,
    %c0_24 = arith.constant 0 : index
    %c0_25 = arith.constant 0 : index
    %c0_26 = arith.constant 0 : index
    %27 = vector.load %arg6[%c0_24, %c0_25, %c0_26] : memref<2x1x1xf32, #tpu.memory_space<vmem>>, vector<2x1x1xf32>
    tpu.vector_store %arg6[%c0_24, %c0_25, %c0_26], %9 {strides = array<i32>} : memref<2x1x1xf32, #tpu.memory_space<vmem>>, vector<2x1x1xf32>,
    %c0_27 = arith.constant 0 : index
    %c0_28 = arith.constant 0 : index
    %c0_29 = arith.constant 0 : index
    %28 = vector.load %arg5[%c0_27, %c0_28, %c0_29] : memref<2x1x8xf32, #tpu.memory_space<vmem>>, vector<2x1x8xf32>
    tpu.vector_store %arg5[%c0_27, %c0_28, %c0_29], %14 {strides = array<i32>} : memref<2x1x8xf32, #tpu.memory_space<vmem>>, vector<2x1x8xf32>,
    %c0_i32_30 = arith.constant 0 : i32
    %29 = arith.cmpi eq, %arg1, %c0_i32_30 : i32
    %30 = arith.extui %29 : i1 to i32
    %c0_i32_31 = arith.constant 0 : i32
    %31 = arith.cmpi ne, %30, %c0_i32_31 : i32
    scf.if %31 {
      %c0_32 = arith.constant 0 : index
      %c0_33 = arith.constant 0 : index
      %c0_34 = arith.constant 0 : index
      %32 = vector.load %arg7[%c0_32, %c0_33, %c0_34] : memref<2x1x1xf32, #tpu.memory_space<vmem>>, vector<2x1x1xf32>
      %33 = tpu.reciprocal %32 : vector<2x1x1xf32> -> vector<2x1x1xf32>
      %c0_35 = arith.constant 0 : index
      %c0_36 = arith.constant 0 : index
      %c0_37 = arith.constant 0 : index
      %34 = vector.load %arg8[%c0_35, %c0_36, %c0_37] : memref<2x1x32xf32, #tpu.memory_space<vmem>>, vector<2x1x32xf32>
      %35 = vector.broadcast %33 : vector<2x1x1xf32> to vector<2x1x32xf32>
      %36 = arith.mulf %34, %35 : vector<2x1x32xf32>
      %c0_38 = arith.constant 0 : index
      %c0_39 = arith.constant 0 : index
      %c0_40 = arith.constant 0 : index
      %37 = vector.load %arg4[%c0_38, %c0_39, %c0_40] : memref<2x1x32xf32, #tpu.memory_space<vmem>>, vector<2x1x32xf32>
      tpu.vector_store %arg4[%c0_38, %c0_39, %c0_40], %36 {strides = array<i32>} : memref<2x1x32xf32, #tpu.memory_space<vmem>>, vector<2x1x32xf32>,
      %c0_41 = arith.constant 0 : index
      %c0_42 = arith.constant 0 : index
      %c0_43 = arith.constant 0 : index
      %38 = vector.load %arg5[%c0_41, %c0_42, %c0_43] : memref<2x1x8xf32, #tpu.memory_space<vmem>>, vector<2x1x8xf32>
      %39 = vector.broadcast %33 : vector<2x1x1xf32> to vector<2x1x8xf32>
      %40 = arith.mulf %38, %39 : vector<2x1x8xf32>
      %c0_44 = arith.constant 0 : index
      %c0_45 = arith.constant 0 : index
      %c0_46 = arith.constant 0 : index
      %41 = vector.load %arg5[%c0_44, %c0_45, %c0_46] : memref<2x1x8xf32, #tpu.memory_space<vmem>>, vector<2x1x8xf32>
      tpu.vector_store %arg5[%c0_44, %c0_45, %c0_46], %40 {strides = array<i32>} : memref<2x1x8xf32, #tpu.memory_space<vmem>>, vector<2x1x8xf32>,
    } else {
    }
    return
  }
  func.func @transform_0(%arg0: i32, %arg1: i32) -> (i32, i32, i32) {
    %c0_i32 = arith.constant 0 : i32
    %c0_i32_0 = arith.constant 0 : i32
    %c0_i32_1 = arith.constant 0 : i32
    return %arg0, %c0_i32, %c0_i32_0 : i32, i32, i32
  }
  func.func @transform_1(%arg0: i32, %arg1: i32) -> (i32, i32, i32) {
    %c0_i32 = arith.constant 0 : i32
    %c0_i32_0 = arith.constant 0 : i32
    return %arg0, %arg1, %c0_i32 : i32, i32, i32
  }
  func.func @transform_2(%arg0: i32, %arg1: i32) -> (i32, i32, i32) {
    %c0_i32 = arith.constant 0 : i32
    %c0_i32_0 = arith.constant 0 : i32
    %c0_i32_1 = arith.constant 0 : i32
    return %arg0, %c0_i32, %c0_i32_0 : i32, i32, i32
  }
  func.func @transform_3(%arg0: i32, %arg1: i32) -> (i32, i32, i32) {
    %c0_i32 = arith.constant 0 : i32
    %c0_i32_0 = arith.constant 0 : i32
    %c0_i32_1 = arith.constant 0 : i32
    return %arg0, %c0_i32, %c0_i32_0 : i32, i32, i32
  }
}

</mosaic_0001>

<llo_original>
// kernel: tpu_custom_call.1
$region0: #{tpu_custom_call.1}
  #allocation0 [shape = 'u32[]', space=smem, size = 0x4, offset = 0x4, fixed_abs, tag = 'smem constant byte address 0x4 - core index']
  #allocation1 [shape = 'u32[72,128]{1,0:T(1,128)}', space=vmem, size = 0x9000, scoped, tag = 'internal scratch']
  #allocation2 [shape = 'f32[2,1,1]{2,1,0:T(1,128)}', space=vmem, size = 0x400, scoped, tag = 'scratch operand']
  #allocation3 [shape = 'f32[2,1,1]{2,1,0:T(1,128)}', space=vmem, size = 0x400, scoped, tag = 'scratch operand']
  #allocation4 [shape = 'f32[2,1,32]{2,1,0:T(1,128)}', space=vmem, size = 0x400, scoped, tag = 'scratch operand']
  %s0 = inlined_call_operand.hbm [shape: f32[2,1,32], index: 0, kind: input, shape index: {}]
  %s1 = inlined_call_operand.hbm [shape: f32[2,8,32], index: 1, kind: input, shape index: {}]
  %s2 = inlined_call_operand.hbm [shape: f32[2,1,32], index: 2, kind: output, shape index: {0}]
  %s3 = inlined_call_operand.hbm [shape: f32[2,1,8], index: 3, kind: output, shape index: {1}]
  %4 = xla_tuple %s2, %s3
  %s5 = sld [smem:[#allocation0]]
  $region42: #{tpu_custom_call.1} parent=0
    _
  %s7 = ssub.s32 1, %s5
  %s8 = scalar_select 0, %s7, %s5
  $region1: #{tpu_custom_call.1} parent=0
    #allocation5 [shape = 'u8[1024]{0}', space=vmem, size = 0x400, scoped, tag = 'input window, operand 0, single buffered']
    #allocation6 [shape = 's32[1]{0}', space=sflag, size = 0x4, scoped, tag = 'scoped memory for tpu_custom_call.1']
    #allocation7 [shape = 's32[1]{0}', space=sflag, size = 0x4, scoped, tag = 'scoped memory for tpu_custom_call.1']
    #allocation8 [shape = 'u8[8192]{0}', space=vmem, size = 0x2000, scoped, tag = 'input window, operand 1, single buffered']
    #allocation9 [shape = 's32[1]{0}', space=sflag, size = 0x4, scoped, tag = 'scoped memory for tpu_custom_call.1']
    #allocation10 [shape = 'u8[1024]{0}', space=vmem, size = 0x400, scoped, tag = 'output window, operand 0, single buffered']
    #allocation11 [shape = 'u8[1024]{0}', space=vmem, size = 0x400, scoped, tag = 'output window, operand 1, single buffered']
    #allocation12 [shape = 's32[1]{0}', space=sflag, size = 0x4, scoped, tag = 'scoped memory for tpu_custom_call.1']
    %9 = vsyncpa [#allocation6], 0
    %10 = vsyncpa [#allocation9], 0
    %11 = vsyncpa [#allocation7], 0
    %12 = vsyncpa [#allocation12], 0
    // Predicated region
    $region2: #{tpu_custom_call.1} parent=1 // pred_check
      _
    $region3: #{tpu_custom_call.1} parent=1 // pred_check_branch
      %14 = sbr.rel (0) target = $region5
    $region4: #{tpu_custom_call.1} parent=1 // pred_region
      %16 = vsyncadd [#allocation6], 0
      %s17 = sshll.u32 %s0, 4
      %s18 = int_to_ptr.hbm [resolvable:$true] %s17
      %s19 = sshll.u32 [#allocation5], 4
      %s20 = int_to_ptr.vmem [resolvable:$true] %s19
      %25 = dma.hbm_to_vmem [thread:$0]  %s18, 32, %s20, [#allocation6], 16, 16, 1
    $region5: #{tpu_custom_call.1} parent=1 // pred_fallthru
      _
    // Predicated region
    $region6: #{tpu_custom_call.1} parent=1 // pred_check
      _
    $region7: #{tpu_custom_call.1} parent=1 // pred_check_branch
      %27 = sbr.rel (0) target = $region9
    $region8: #{tpu_custom_call.1} parent=1 // pred_region
      %29 = vsyncadd [#allocation9], 0
      %s30 = sshll.u32 %s1, 4
      %s31 = int_to_ptr.hbm [resolvable:$true] %s30
      %s32 = sshll.u32 [#allocation8], 4
      %s33 = int_to_ptr.vmem [resolvable:$true] %s32
      %38 = dma.hbm_to_vmem [thread:$0]  %s31, 256, %s33, [#allocation9], 128, 128, 8
    $region9: #{tpu_custom_call.1} parent=1 // pred_fallthru
      _
    // Predicated region
    $region10: #{tpu_custom_call.1} parent=1 // pred_check
      _
    $region11: #{tpu_custom_call.1} parent=1 // pred_check_branch
      %40 = sbr.rel (0) target = $region13
    $region12: #{tpu_custom_call.1} parent=1 // pred_region
      %42 = dma.done [#allocation6], 32
    $region13: #{tpu_custom_call.1} parent=1 // pred_fallthru
      _
    // Predicated region
    $region14: #{tpu_custom_call.1} parent=1 // pred_check
      _
    $region15: #{tpu_custom_call.1} parent=1 // pred_check_branch
      %44 = sbr.rel (0) target = $region17
    $region16: #{tpu_custom_call.1} parent=1 // pred_region
      %46 = dma.done [#allocation9], 256
    $region17: #{tpu_custom_call.1} parent=1 // pred_fallthru
      _
    %p47 = scmp.eq.s32.totalorder 0, 0
    // Predicated region
    $region18: #{tpu_custom_call.1} parent=1 // pred_check
      %p48 = pneg %p47
    $region19: #{tpu_custom_call.1} parent=1 // pred_check_branch
      %50 = sbr.rel (%p48) target = $region21
    $region20: #{tpu_custom_call.1} parent=1 // pred_region
      %vm51 = vcmask 0
      %52 = vst.msk [vmem:[#allocation2] sm:$0x1] %vm51, -inf
      %53 = vst.msk [vmem:[#allocation2 + $0x1] sm:$0x1] %vm51, -inf
      %54 = vst.msk [vmem:[#allocation3] sm:$0x1] %vm51, 0.0
      %55 = vst.msk [vmem:[#allocation3 + $0x1] sm:$0x1] %vm51, 0.0
      %vm56 = vcmask 253952
      %57 = vst.msk [vmem:[#allocation4] sm:$0x1] %vm56, 0.0
      %58 = vst.msk [vmem:[#allocation4 + $0x1] sm:$0x1] %vm56, 0.0
      %vm59 = vcmask 57344
      %60 = vst.msk [vmem:[#allocation11] sm:$0x1] %vm59, 0.0
      %61 = vst.msk [vmem:[#allocation11 + $0x1] sm:$0x1] %vm59, 0.0
    $region21: #{tpu_custom_call.1} parent=1 // pred_fallthru
      _
    %v62 = vld [vmem:[#allocation5] sm:$0x1]
    %v63 = vld [vmem:[#allocation5 + $0x1] sm:$0x1]
    %v64 = vld [vmem:[#allocation8] sm:$0xff]
    %v65 = vld [vmem:[#allocation8 + $0x8] sm:$0xff]
    %vm66 = vcmask 261120
    %v68 = vsel %vm66, %v62, 0
    %v71 = vsel %vm66, %v64, 0
    %73 = vmatpush.xpose.msra.mxu0 0.0
    %74 = vmatpush.xpose.msra.mxu0 0.0
    %75 = vmatpush.xpose.msra.mxu0 0.0
    %76 = vmatpush.xpose.msra.mxu0 0.0
    %77 = vmatpush.xpose.msra.mxu0 0.0
    %78 = vmatpush.xpose.msra.mxu0 0.0
    %79 = vmatpush.xpose.msra.mxu0 0.0
    %80 = vmatpush.xpose.msra.mxu0 0.0
    %81 = vmatpush.xpose.msra.mxu0 0.0
    %82 = vmatpush.xpose.msra.mxu0 0.0
    %83 = vmatpush.xpose.msra.mxu0 0.0
    %84 = vmatpush.xpose.msra.mxu0 0.0
    %85 = vmatpush.xpose.msra.mxu0 0.0
    %86 = vmatpush.xpose.msra.mxu0 0.0
    %87 = vmatpush.xpose.msra.mxu0 0.0
    %88 = vmatpush.xpose.msra.mxu0 %v71
    %89 = vmatmul.f32.gmra.mxu0 %v68
    %v90 = vpop.f32.mrf.mxu0
    %v91 = vadd.f32 0.0, %v90
    %92 = vdwg.mxu0
    %v94 = vsel %vm66, %v63, 0
    %v97 = vsel %vm66, %v65, 0
    %99 = vmatpush.xpose.msra.mxu0 0.0
    %100 = vmatpush.xpose.msra.mxu0 0.0
    %101 = vmatpush.xpose.msra.mxu0 0.0
    %102 = vmatpush.xpose.msra.mxu0 0.0
    %103 = vmatpush.xpose.msra.mxu0 0.0
    %104 = vmatpush.xpose.msra.mxu0 0.0
    %105 = vmatpush.xpose.msra.mxu0 0.0
    %106 = vmatpush.xpose.msra.mxu0 0.0
    %107 = vmatpush.xpose.msra.mxu0 0.0
    %108 = vmatpush.xpose.msra.mxu0 0.0
    %109 = vmatpush.xpose.msra.mxu0 0.0
    %110 = vmatpush.xpose.msra.mxu0 0.0
    %111 = vmatpush.xpose.msra.mxu0 0.0
    %112 = vmatpush.xpose.msra.mxu0 0.0
    %113 = vmatpush.xpose.msra.mxu0 0.0
    %114 = vmatpush.xpose.msra.mxu0 %v97
    %115 = vmatmul.f32.gmra.mxu0 %v94
    %v116 = vpop.f32.mrf.mxu0
    %v117 = vadd.f32 0.0, %v116
    %118 = vdwg.mxu0
    %v119 = vld [vmem:[#allocation2] sm:$0x1]
    %v120 = vld [vmem:[#allocation2 + $0x1] sm:$0x1]
    %vm121 = vcmask 57344
    %v122 = vsel %vm121, %v91, -inf
    %123 = vmax.xlane.f32.xlu0 %v122
    %v124 = vpop.xlane.xlu0 %123
    %v125 = vsel %vm121, %v117, -inf
    %126 = vmax.xlane.f32.xlu0 %v125
    %v127 = vpop.xlane.xlu0 %126
    %v128 = vmax.f32 %v119, %v124
    %v129 = vmax.f32 %v120, %v127
    %v130 = vsub.f32 %v119, %v128
    %v131 = vsub.f32 %v120, %v129
    %v132 = vmul.f32 %v130, 1.442695
    %v133 = vpow.pop %v132
    %v134 = vmul.f32 %v131, 1.442695
    %v135 = vpow.pop %v134
    %137 = vset.pattern.permute.xlu0 0
    %138 = vperm.xlu0 %137, %v128
    %v139 = vpop.permute.xlu0 %138
    %v141 = vperm.slane %v139, 0
    %143 = vset.pattern.permute.xlu0 0
    %144 = vperm.xlu0 %143, %v129
    %v145 = vpop.permute.xlu0 %144
    %v147 = vperm.slane %v145, 0
    %v148 = vsub.f32 %v91, %v141
    %v149 = vsub.f32 %v117, %v147
    %v150 = vmul.f32 %v148, 1.442695
    %v151 = vpow.pop %v150
    %v152 = vmul.f32 %v149, 1.442695
    %v153 = vpow.pop %v152
    %v154 = vld [vmem:[#allocation3] sm:$0x1]
    %v155 = vld [vmem:[#allocation3 + $0x1] sm:$0x1]
    %v156 = vmul.f32 %v133, %v154
    %v157 = vmul.f32 %v135, %v155
    %v158 = vsel %vm121, %v151, 0.0
    %159 = vadd.xlane.f32.xlu0 %v158
    %v160 = vpop.xlane.xlu0 %159
    %v161 = vsel %vm121, %v153, 0.0
    %162 = vadd.xlane.f32.xlu0 %v161
    %v163 = vpop.xlane.xlu0 %162
    %v164 = vadd.f32 %v156, %v160
    %v165 = vadd.f32 %v157, %v163
    %vm166 = vcmask 0
    %167 = vst.msk [vmem:[#allocation3] sm:$0x1] %vm166, %v164
    %168 = vst.msk [vmem:[#allocation3 + $0x1] sm:$0x1] %vm166, %v165
    %v169 = vld [vmem:[#allocation4] sm:$0x1]
    %v170 = vld [vmem:[#allocation4 + $0x1] sm:$0x1]
    %172 = vset.pattern.permute.xlu0 0
    %173 = vperm.xlu0 %172, %v133
    %v174 = vpop.permute.xlu0 %173
    %v176 = vperm.slane %v174, 0
    %178 = vset.pattern.permute.xlu0 0
    %179 = vperm.xlu0 %178, %v135
    %v180 = vpop.permute.xlu0 %179
    %v182 = vperm.slane %v180, 0
    %v183 = vmul.f32 %v176, %v169
    %v184 = vmul.f32 %v182, %v170
    %vm185 = vcmask 64512
    %v187 = vsel %vm185, %v151, 0
    %189 = vmatpush.msra.mxu0 0.0
    %190 = vmatpush.msra.mxu0 0.0
    %191 = vmatpush.msra.mxu0 0.0
    %192 = vmatpush.msra.mxu0 0.0
    %193 = vmatpush.msra.mxu0 0.0
    %194 = vmatpush.msra.mxu0 0.0
    %195 = vmatpush.msra.mxu0 0.0
    %196 = vmatpush.msra.mxu0 0.0
    %197 = vmatpush.msra.mxu0 0.0
    %198 = vmatpush.msra.mxu0 0.0
    %199 = vmatpush.msra.mxu0 0.0
    %200 = vmatpush.msra.mxu0 0.0
    %201 = vmatpush.msra.mxu0 0.0
    %202 = vmatpush.msra.mxu0 0.0
    %203 = vmatpush.msra.mxu0 0.0
    %204 = vmatpush.msra.mxu0 %v64
    %205 = vmatmul.f32.gmra.mxu0 %v187
    %v206 = vpop.f32.mrf.mxu0
    %v207 = vadd.f32 0.0, %v206
    %208 = vdwg.mxu0
    %v210 = vsel %vm185, %v153, 0
    %212 = vmatpush.msra.mxu0 0.0
    %213 = vmatpush.msra.mxu0 0.0
    %214 = vmatpush.msra.mxu0 0.0
    %215 = vmatpush.msra.mxu0 0.0
    %216 = vmatpush.msra.mxu0 0.0
    %217 = vmatpush.msra.mxu0 0.0
    %218 = vmatpush.msra.mxu0 0.0
    %219 = vmatpush.msra.mxu0 0.0
    %220 = vmatpush.msra.mxu0 0.0
    %221 = vmatpush.msra.mxu0 0.0
    %222 = vmatpush.msra.mxu0 0.0
    %223 = vmatpush.msra.mxu0 0.0
    %224 = vmatpush.msra.mxu0 0.0
    %225 = vmatpush.msra.mxu0 0.0
    %226 = vmatpush.msra.mxu0 0.0
    %227 = vmatpush.msra.mxu0 %v65
    %228 = vmatmul.f32.gmra.mxu0 %v210
    %v229 = vpop.f32.mrf.mxu0
    %v230 = vadd.f32 0.0, %v229
    %231 = vdwg.mxu0
    %v232 = vadd.f32 %v183, %v207
    %v233 = vadd.f32 %v184, %v230
    %vm234 = vcmask 253952
    %235 = vst.msk [vmem:[#allocation4] sm:$0x1] %vm234, %v232
    %236 = vst.msk [vmem:[#allocation4 + $0x1] sm:$0x1] %vm234, %v233
    %237 = vst.msk [vmem:[#allocation2] sm:$0x1] %vm166, %v128
    %238 = vst.msk [vmem:[#allocation2 + $0x1] sm:$0x1] %vm166, %v129
    %239 = vst.msk [vmem:[#allocation11] sm:$0x1] %vm121, %v151
    %240 = vst.msk [vmem:[#allocation11 + $0x1] sm:$0x1] %vm121, %v153
    // Predicated region
    $region22: #{tpu_custom_call.1} parent=1 // pred_check
      %p241 = pneg %p47
    $region23: #{tpu_custom_call.1} parent=1 // pred_check_branch
      %243 = sbr.rel (%p241) target = $region25
    $region24: #{tpu_custom_call.1} parent=1 // pred_region
      %v244 = vld [vmem:[#allocation3] sm:$0x1]
      %v245 = vld [vmem:[#allocation3 + $0x1] sm:$0x1]
      %v246 = vrcp.pop %v244
      %v247 = vmul.f32 %v244, %v246
      %v248 = vsub.f32 1.0, %v247
      %v249 = vmul.f32 %v246, %v248
      %v250 = vadd.f32 %v246, %v249
      %vm251 = vweird.f32 %v244
      %vm252 = vweird.f32 %v246
      %vm253 = vmor %vm251, %vm252
      %v254 = vsel %vm253, %v246, %v250
      %v255 = vand.u32 2147483647, %v244
      %vm256 = vcmp.eq.f32.partialorder %v255, 8.507059e+37
      %v257 = vand.u32 %v244, 2147483648
      %v258 = vor.u32 1.1754944e-38, %v257
      %v259 = vsel %vm256, %v258, %v254
      %v260 = vrcp.pop %v245
      %v261 = vmul.f32 %v245, %v260
      %v262 = vsub.f32 1.0, %v261
      %v263 = vmul.f32 %v260, %v262
      %v264 = vadd.f32 %v260, %v263
      %vm265 = vweird.f32 %v245
      %vm266 = vweird.f32 %v260
      %vm267 = vmor %vm265, %vm266
      %v268 = vsel %vm267, %v260, %v264
      %v269 = vand.u32 2147483647, %v245
      %vm270 = vcmp.eq.f32.partialorder %v269, 8.507059e+37
      %v271 = vand.u32 %v245, 2147483648
      %v272 = vor.u32 1.1754944e-38, %v271
      %v273 = vsel %vm270, %v272, %v268
      %v274 = vld [vmem:[#allocation4] sm:$0x1]
      %v275 = vld [vmem:[#allocation4 + $0x1] sm:$0x1]
      %277 = vset.pattern.permute.xlu0 0
      %278 = vperm.xlu0 %277, %v259
      %v279 = vpop.permute.xlu0 %278
      %v281 = vperm.slane %v279, 0
      %283 = vset.pattern.permute.xlu0 0
      %284 = vperm.xlu0 %283, %v273
      %v285 = vpop.permute.xlu0 %284
      %v287 = vperm.slane %v285, 0
      %v288 = vmul.f32 %v274, %v281
      %v289 = vmul.f32 %v275, %v287
      %290 = vst.msk [vmem:[#allocation10] sm:$0x1] %vm234, %v288
      %291 = vst.msk [vmem:[#allocation10 + $0x1] sm:$0x1] %vm234, %v289
      %v292 = vld [vmem:[#allocation11] sm:$0x1]
      %v293 = vld [vmem:[#allocation11 + $0x1] sm:$0x1]
      %v294 = vmul.f32 %v292, %v281
      %v295 = vmul.f32 %v293, %v287
      %296 = vst.msk [vmem:[#allocation11] sm:$0x1] %vm121, %v294
      %297 = vst.msk [vmem:[#allocation11 + $0x1] sm:$0x1] %vm121, %v295
    $region25: #{tpu_custom_call.1} parent=1 // pred_fallthru
      _
    // Predicated region
    $region26: #{tpu_custom_call.1} parent=1 // pred_check
      _
    $region27: #{tpu_custom_call.1} parent=1 // pred_check_branch
      %299 = sbr.rel (0) target = $region29
    $region28: #{tpu_custom_call.1} parent=1 // pred_region
      %301 = vsyncadd [#allocation7], 0
      %s302 = sshll.u32 [#allocation10], 4
      %s303 = int_to_ptr.vmem [resolvable:$true] %s302
      %s304 = sshll.u32 %s2, 4
      %s305 = int_to_ptr.hbm [resolvable:$true] %s304
      %310 = dma.vmem_to_hbm [thread:$0]  %s303, 32, %s305, [#allocation7], 16, 16, 1
    $region29: #{tpu_custom_call.1} parent=1 // pred_fallthru
      _
    // Predicated region
    $region30: #{tpu_custom_call.1} parent=1 // pred_check
      _
    $region31: #{tpu_custom_call.1} parent=1 // pred_check_branch
      %312 = sbr.rel (0) target = $region33
    $region32: #{tpu_custom_call.1} parent=1 // pred_region
      %314 = vsyncadd [#allocation12], 0
      %s315 = sshll.u32 [#allocation11], 4
      %s316 = int_to_ptr.vmem [resolvable:$true] %s315
      %s317 = sshll.u32 %s3, 4
      %s318 = int_to_ptr.hbm [resolvable:$true] %s317
      %323 = dma.vmem_to_hbm [thread:$0]  %s316, 32, %s318, [#allocation12], 16, 16, 1
    $region33: #{tpu_custom_call.1} parent=1 // pred_fallthru
      _
    // Predicated region
    $region34: #{tpu_custom_call.1} parent=1 // pred_check
      _
    $region35: #{tpu_custom_call.1} parent=1 // pred_check_branch
      %325 = sbr.rel (0) target = $region37
    $region36: #{tpu_custom_call.1} parent=1 // pred_region
      %327 = dma.done [#allocation7], 32
    $region37: #{tpu_custom_call.1} parent=1 // pred_fallthru
      _
    // Predicated region
    $region38: #{tpu_custom_call.1} parent=1 // pred_check
      _
    $region39: #{tpu_custom_call.1} parent=1 // pred_check_branch
      %329 = sbr.rel (0) target = $region41
    $region40: #{tpu_custom_call.1} parent=1 // pred_region
      %331 = dma.done [#allocation12], 32
    $region41: #{tpu_custom_call.1} parent=1 // pred_fallthru
      _
    %332 = vsyncpa [#allocation6], 1
    %333 = vsyncpa [#allocation9], 1
    %334 = vsyncpa [#allocation7], 1
    %335 = vsyncpa [#allocation12], 1

</llo_original>
